<compile_context>
chip_gen: v7x
topology: tpu7x:2x2x1
jax: 0.10.0
libtpu: 0.0.40
codegen_flags: <defaults>
</compile_context>

<pallas_src>
import functools

import jax
import jax.numpy as jnp
from jax.experimental import pallas as pl
from jax.experimental.pallas import tpu as pltpu


def _subsample_pad_kernel(x_ref, s_ref, o_ref, *, lo, hi):
    """One grid step.

    x_ref: (NB, C*H*W)          NB flattened input samples
    s_ref: (C*H*W, C*Ho*Wo)     block-diagonal 0/1 selection matrix (bf16)
    o_ref: (NB, C_out*Ho*Wo)    NB flattened, channel-padded output samples
    lo/hi: static lane bounds of the non-padded channel range.
    """
    nb, width = o_ref.shape

    # Zero only the padded channel ranges (never the whole block).
    if lo > 0:
        o_ref[:, :lo] = jnp.zeros((nb, lo), o_ref.dtype)
    if hi < width:
        o_ref[:, hi:] = jnp.zeros((nb, width - hi), o_ref.dtype)

    # Single merged matmul: (NB, C*H*W) @ (C*H*W, C*Ho*Wo).
    y = jnp.dot(x_ref[...], s_ref[...].astype(x_ref.dtype),
                preferred_element_type=jnp.float32)
    o_ref[:, lo:hi] = y.astype(o_ref.dtype)


@functools.lru_cache(maxsize=None)
def _selection_matrix(c, h, w):
    """Block-diagonal 0/1 matrix S with (x.reshape(n, c*h*w) @ S)[i, j*HoWo + q]
    == x[i, j, 2*(q//Wo), 2*(q%Wo)].  Stored in bf16 (0/1 are exact)."""
    ho, wo = (h + 1) // 2, (w + 1) // 2
    hw, howo = h * w, ho * wo
    p = jnp.arange(c * hw)
    m = jnp.arange(c * howo)
    pj, pr = p // hw, p % hw          # input channel, flat spatial index
    mj, mq = m // howo, m % howo      # output channel, flat spatial index
    sel = ((pj[:, None] == mj[None, :])
           & ((pr[:, None] // w) == 2 * (mq[None, :] // wo))
           & ((pr[:, None] % w) == 2 * (mq[None, :] % wo)))
    return sel.astype(jnp.bfloat16)


@functools.partial(jax.jit, static_argnames=("planes",))
def lambda_layer(x, planes=None):
    """Pallas equivalent of:
       F.pad(x[:, :, ::2, ::2], (0, 0, 0, 0, planes//4, planes//4), 'constant', 0)
    x: (N, C, H, W) float32, NCHW.
    """
    n, c, h, w = x.shape
    if planes is None:
        planes = 2 * c  # canonical ResNet option-A shortcut doubles the channels
    pad = planes // 4
    c_out = c + 2 * pad
    ho, wo = (h + 1) // 2, (w + 1) // 2
    hw, howo = h * w, ho * wo
    itemsize = jnp.dtype(x.dtype).itemsize

    sel = _selection_matrix(c, h, w)
    sel_bytes = sel.size * sel.dtype.itemsize

    # ---- batch-block (NB) selection against a VMEM budget ------------------
    # Double-buffered input + output rows plus the (double-buffered) selection
    # matrix must fit comfortably on every generation (v7x: 64 MiB physical).
    budget = 28 << 20
    per_sample = (c * hw + c_out * howo) * itemsize      # one in-row + one out-row
    avail = max(budget - 2 * sel_bytes, 2 * per_sample)
    nb = max(1, min(n, avail // (2 * per_sample)))
    if n >= 2:
        nb = max(1, min(nb, n // 2))   # keep >= 2 grid steps for the parallel axis
    if n % nb != 0:
        # Prefer a nearby exact divisor (no padding copy); otherwise pad the batch.
        div = max(d for d in range(1, nb + 1) if n % d == 0)
        if 2 * div >= nb:
            nb = div
    n_pad = ((n + nb - 1) // nb) * nb
    g = n_pad // nb

    # ---- flatten (free, contiguous) and pad the batch if needed ------------
    x2 = x.reshape(n, c * hw)
    if n_pad != n:
        x2 = jnp.pad(x2, ((0, n_pad - n), (0, 0)))
    x3 = x2.reshape(g, nb, c * hw)

    lo, hi = pad * howo, (pad + c) * howo
    kernel = functools.partial(_subsample_pad_kernel, lo=lo, hi=hi)

    vmem_needed = 2 * (nb * c * hw * itemsize
                       + nb * c_out * howo * itemsize
                       + sel_bytes) + (2 << 20)
    vmem_limit = int(min(max(vmem_needed, 16 << 20), 32 << 20))

    grid_spec = pltpu.PrefetchScalarGridSpec(
        num_scalar_prefetch=0,
        grid=(g,),
        in_specs=[
            # Batch-block of NB flattened samples; last two dims are full,
            # so any NB satisfies the (8, 128) block constraint.
            pl.BlockSpec((None, nb, c * hw), lambda b: (b, 0, 0)),
            # Constant block index -> fetched once, reused every step.
            pl.BlockSpec((c * hw, c * howo), lambda b: (0, 0)),
        ],
        out_specs=pl.BlockSpec((None, nb, c_out * howo), lambda b: (b, 0, 0)),
    )

    out3 = pl.pallas_call(
        kernel,
        out_shape=jax.ShapeDtypeStruct((g, nb, c_out * howo), x.dtype),
        grid_spec=grid_spec,
        compiler_params=pltpu.CompilerParams(
            dimension_semantics=("parallel",),
            vmem_limit_bytes=vmem_limit),
    )(x3, sel)

    out = out3.reshape(n_pad, c_out, ho, wo)
    return out[:n] if n_pad != n else out


def _reference(x, planes):
    """Plain-JAX reference of the PyTorch lambda."""
    pad = planes // 4
    y = x[:, :, ::2, ::2]
    return jnp.pad(y, ((0, 0), (pad, pad), (0, 0), (0, 0)))


if __name__ == "__main__":
    key = jax.random.PRNGKey(0)
    x = jax.random.normal(key, (2, 4, 16, 16), dtype=jnp.float32)  # NCHW
    planes = 8  # -> pad channels by planes//4 = 2 on each side

    out = lambda_layer(x, planes=planes)
    out = jax.block_until_ready(out)

    ref = _reference(x, planes)
    assert out.shape == ref.shape == (2, 8, 8, 8), out.shape
    assert jnp.allclose(out, ref, atol=1e-5, rtol=1e-5), "mismatch vs reference"

    print("KERNEL_OK")
</pallas_src>

<mosaic_0001>
module attributes {stable_mosaic.version = 11 : i64} {
  func.func @_subsample_pad_kernel(%arg0: i32, %arg1: memref<1x1x1024xf32, #tpu.memory_space<vmem>>, %arg2: memref<1024x256xbf16, #tpu.memory_space<vmem>>, %arg3: memref<1x1x512xf32, #tpu.memory_space<vmem>>) attributes {dimension_semantics = [#tpu.dimension_semantics<parallel>], iteration_bounds = array<i64: 2>, scalar_prefetch = 0 : i64, scratch_operands = 0 : i64, tpu.core_type = #tpu.core_type<tc>, window_params = [{transform_indices = @transform_0, window_bounds = array<i64: 1, 1, 1024>}, {pipeline_mode = #tpu.pipeline_mode<synchronous>, transform_indices = @transform_1, window_bounds = array<i64: 1024, 256>}, {transform_indices = @transform_2, window_bounds = array<i64: 1, 1, 512>}]} {
    %cst = arith.constant 0.000000e+00 : f32
    %0 = vector.broadcast %cst : f32 to vector<1x128xf32>
    %c0 = arith.constant 0 : index
    %c0_0 = arith.constant 0 : index
    %c0_1 = arith.constant 0 : index
    %1 = vector.load %arg3[%c0, %c0_0, %c0_1] : memref<1x1x512xf32, #tpu.memory_space<vmem>>, vector<1x1x128xf32>
    %2 = vector.shape_cast %1 : vector<1x1x128xf32> to vector<1x128xf32>
    %3 = vector.shape_cast %0 : vector<1x128xf32> to vector<1x1x128xf32>
    tpu.vector_store %arg3[%c0, %c0_0, %c0_1], %3 {strides = array<i32>} : memref<1x1x512xf32, #tpu.memory_space<vmem>>, vector<1x1x128xf32>,
    %cst_2 = arith.constant 0.000000e+00 : f32
    %4 = vector.broadcast %cst_2 : f32 to vector<1x128xf32>
    %c0_3 = arith.constant 0 : index
    %c0_4 = arith.constant 0 : index
    %c384 = arith.constant 384 : index
    %5 = vector.load %arg3[%c0_3, %c0_4, %c384] : memref<1x1x512xf32, #tpu.memory_space<vmem>>, vector<1x1x128xf32>
    %6 = vector.shape_cast %5 : vector<1x1x128xf32> to vector<1x128xf32>
    %7 = vector.shape_cast %4 : vector<1x128xf32> to vector<1x1x128xf32>
    tpu.vector_store %arg3[%c0_3, %c0_4, %c384], %7 {strides = array<i32>} : memref<1x1x512xf32, #tpu.memory_space<vmem>>, vector<1x1x128xf32>,
    %c0_5 = arith.constant 0 : index
    %c0_6 = arith.constant 0 : index
    %c0_7 = arith.constant 0 : index
    %8 = vector.load %arg1[%c0_5, %c0_6, %c0_7] : memref<1x1x1024xf32, #tpu.memory_space<vmem>>, vector<1x1x1024xf32>
    %9 = vector.shape_cast %8 : vector<1x1x1024xf32> to vector<1x1024xf32>
    %c0_8 = arith.constant 0 : index
    %c0_9 = arith.constant 0 : index
    %10 = vector.load %arg2[%c0_8, %c0_9] : memref<1024x256xbf16, #tpu.memory_space<vmem>>, vector<1024x256xbf16>
    %11 = arith.extf %10 : vector<1024x256xbf16> to vector<1024x256xf32>
    %cst_10 = arith.constant dense<0.000000e+00> : vector<1x256xf32>
    %12 = tpu.matmul %9, %11, %cst_10 {dimension_numbers = #tpu.dot_dimension_numbers<[1], [0], [0], [1], [0, 0, 1, 1], [], []>} : vector<1x1024xf32>, vector<1024x256xf32>, vector<1x256xf32> -> vector<1x256xf32>
    %c0_11 = arith.constant 0 : index
    %c0_12 = arith.constant 0 : index
    %c128 = arith.constant 128 : index
    %13 = vector.load %arg3[%c0_11, %c0_12, %c128] : memref<1x1x512xf32, #tpu.memory_space<vmem>>, vector<1x1x256xf32>
    %14 = vector.shape_cast %13 : vector<1x1x256xf32> to vector<1x256xf32>
    %15 = vector.shape_cast %12 : vector<1x256xf32> to vector<1x1x256xf32>
    tpu.vector_store %arg3[%c0_11, %c0_12, %c128], %15 {strides = array<i32>} : memref<1x1x512xf32, #tpu.memory_space<vmem>>, vector<1x1x256xf32>,
    return
  }
  func.func @transform_0(%arg0: i32) -> (i32, i32, i32) {
    %c0_i32 = arith.constant 0 : i32
    %c0_i32_0 = arith.constant 0 : i32
    %c0_i32_1 = arith.constant 0 : i32
    return %arg0, %c0_i32, %c0_i32_0 : i32, i32, i32
  }
  func.func @transform_1(%arg0: i32) -> (i32, i32) {
    %c0_i32 = arith.constant 0 : i32
    %c0_i32_0 = arith.constant 0 : i32
    %c0_i32_1 = arith.constant 0 : i32
    return %c0_i32, %c0_i32_0 : i32, i32
  }
  func.func @transform_2(%arg0: i32) -> (i32, i32, i32) {
    %c0_i32 = arith.constant 0 : i32
    %c0_i32_0 = arith.constant 0 : i32
    %c0_i32_1 = arith.constant 0 : i32
    return %arg0, %c0_i32, %c0_i32_0 : i32, i32, i32
  }
}

</mosaic_0001>

<llo_original>
// kernel: lambda_layer.1
$region0: #{lambda_layer.1}
  #allocation0 [shape = 'u32[]', space=smem, size = 0x4, offset = 0x4, fixed_abs, tag = 'smem constant byte address 0x4 - core index']
  #allocation1 [shape = 'u32[144,128]{1,0:T(1,128)}', space=vmem, size = 0x12000, scoped, tag = 'internal scratch']
  %s0 = inlined_call_operand.vmem [shape: f32[2,1,1024], index: 0, kind: input, shape index: {}]
  %s1 = inlined_call_operand.vmem [shape: bf16[1024,256], index: 1, kind: input, shape index: {}]
  %s2 = inlined_call_operand.vmem [shape: f32[2,1,512], index: 2, kind: output, shape index: {}]
  %s3 = sld [smem:[#allocation0]]
  $region41: #{lambda_layer.1} parent=0
    _
  %s5 = ssub.s32 1, %s3
  %s6 = scalar_select 0, %s5, %s3
  loop: start=0, step=1, limit=4
  $region2: #{lambda_layer.1} parent=0 // loop_pre_header
    _
  $region3: #{lambda_layer.1} parent=0 // loop_header
    %s8 = sphi 0, %s12
    %p9 = scmp.ge.s32.totalorder %s8, 4
    %s18 = sphi 0, %s20
    %s21 = sphi 0, %s18
    %s22 = sphi 0, %s21
    %s38 = sphi 0, %s22
    %s42 = sphi 0, %s42
    %s44 = sphi 0, %s42
    %s45 = sphi 0, %s44
    %s59 = sphi 0, %s45
    %s65 = sphi 0, %s67
    %s68 = sphi 0, %s65
    %s69 = sphi 0, %s68
    %s85 = sphi 0, %s69
  $region4: #{lambda_layer.1} parent=0 // loop_header_branch
    %11 = sbr.rel (%p9) target = $region8
  $region5: #{lambda_layer.1} parent=0 // loop_body
    %s13 = ssub.s32 %s8, 1
    %s14 = ssub.s32 %s8, 2
    %s15 = sadd.s32 %s8, 1
    %s16 = ssub.s32 %s8, %s15
    %p17 = scmp.eq.s32.totalorder %s16, 0
    %s19 = sadd.s32 %s18, 1
    %s20 = scalar_select %p17, %s18, %s19
    %p23 = pneg %p17
    %p24 = scmp.eq.s32.totalorder %s8, 1
    %p25 = por %p23, %p24
    %p26 = scmp.ne.s32.totalorder %s18, %s21
    %p27 = scmp.eq.s32.totalorder %s8, 0
    %p28 = por %p26, %p27
    %p29 = scmp.ne.s32.totalorder %s18, %s21
    %p30 = scmp.eq.s32.totalorder %s13, 1
    %p31 = por %p29, %p30
    %p32 = scmp.ne.s32.totalorder %s21, %s22
    %p33 = scmp.eq.s32.totalorder %s13, 0
    %p34 = por %p32, %p33
    %p35 = scmp.ne.s32.totalorder %s21, %s22
    %p36 = scmp.eq.s32.totalorder %s14, 1
    %p37 = por %p35, %p36
    %p39 = scmp.ne.s32.totalorder %s22, %s38
    %p40 = scmp.eq.s32.totalorder %s14, 0
    %p41 = por %p39, %p40
    %s43 = sadd.s32 %s42, 1
    %p46 = scmp.eq.s32.totalorder %s8, 1
    %p47 = scmp.ne.s32.totalorder %s42, %s44
    %p48 = scmp.eq.s32.totalorder %s8, 0
    %p49 = por %p47, %p48
    %p50 = scmp.ne.s32.totalorder %s42, %s44
    %p51 = scmp.eq.s32.totalorder %s13, 1
    %p52 = por %p50, %p51
    %p53 = scmp.ne.s32.totalorder %s44, %s45
    %p54 = scmp.eq.s32.totalorder %s13, 0
    %p55 = por %p53, %p54
    %p56 = scmp.ne.s32.totalorder %s44, %s45
    %p57 = scmp.eq.s32.totalorder %s14, 1
    %p58 = por %p56, %p57
    %p60 = scmp.ne.s32.totalorder %s45, %s59
    %p61 = scmp.eq.s32.totalorder %s14, 0
    %p62 = por %p60, %p61
    %s63 = ssub.s32 %s8, %s15
    %p64 = scmp.eq.s32.totalorder %s63, 0
    %s66 = sadd.s32 %s65, 1
    %s67 = scalar_select %p64, %s65, %s66
    %p70 = pneg %p64
    %p71 = scmp.eq.s32.totalorder %s8, 1
    %p72 = por %p70, %p71
    %p73 = scmp.ne.s32.totalorder %s65, %s68
    %p74 = scmp.eq.s32.totalorder %s8, 0
    %p75 = por %p73, %p74
    %p76 = scmp.ne.s32.totalorder %s65, %s68
    %p77 = scmp.eq.s32.totalorder %s13, 1
    %p78 = por %p76, %p77
    %p79 = scmp.ne.s32.totalorder %s68, %s69
    %p80 = scmp.eq.s32.totalorder %s13, 0
    %p81 = por %p79, %p80
    %p82 = scmp.ne.s32.totalorder %s68, %s69
    %p83 = scmp.eq.s32.totalorder %s14, 1
    %p84 = por %p82, %p83
    %p86 = scmp.ne.s32.totalorder %s69, %s85
    %p87 = scmp.eq.s32.totalorder %s14, 0
    %p88 = por %p86, %p87
    %p89 = scmp.le.s32.totalorder 1, %s8
    %p90 = scmp.lt.s32.totalorder %s8, 3
    %p91 = pnand %p89, %p90
    %p92 = pneg %p91
    // Predicated region
    $region9: #{lambda_layer.1} parent=5 // pred_check
      _
    $region10: #{lambda_layer.1} parent=5 // pred_check_branch
      %94 = sbr.rel (%p91) target = $region12
    $region11: #{lambda_layer.1} parent=5 // pred_region
      %s95 = ssub.s32 %s8, 1
      // Predicated region
      $region13: #{lambda_layer.1} parent=11 // pred_check
        %p96 = pneg %p55
      $region14: #{lambda_layer.1} parent=11 // pred_check_branch
        %98 = sbr.rel (%p96) target = $region16
      $region15: #{lambda_layer.1} parent=11 // pred_region
        _
      $region16: #{lambda_layer.1} parent=11 // pred_fallthru
        _
    $region12: #{lambda_layer.1} parent=5 // pred_fallthru
      _
    %p99 = scmp.lt.s32.totalorder %s8, 2
    // Predicated region
    $region17: #{lambda_layer.1} parent=5 // pred_check
      %p100 = pneg %p99
    $region18: #{lambda_layer.1} parent=5 // pred_check_branch
      %102 = sbr.rel (%p100) target = $region20
    $region19: #{lambda_layer.1} parent=5 // pred_region
      // Predicated region
      $region21: #{lambda_layer.1} parent=19 // pred_check
        %p103 = pneg %p28
      $region22: #{lambda_layer.1} parent=19 // pred_check_branch
        %105 = sbr.rel (%p103) target = $region24
      $region23: #{lambda_layer.1} parent=19 // pred_region
        %p106 = scmp.lt.s32.totalorder %s8, 1
        %s107 = scalar_select %p106, %s8, 1
        %s108 = smul.addr %s107, 8
        %s109 = scalar_lea.vmem %s0, %s108
      $region24: #{lambda_layer.1} parent=19 // pred_fallthru
        _
    $region20: #{lambda_layer.1} parent=5 // pred_fallthru
      _
    %p110 = scmp.le.s32.totalorder 1, %s8
    %p111 = scmp.lt.s32.totalorder %s8, 3
    %p112 = pnand %p110, %p111
    %p113 = pneg %p112
    // Predicated region
    $region25: #{lambda_layer.1} parent=5 // pred_check
      _
    $region26: #{lambda_layer.1} parent=5 // pred_check_branch
      %115 = sbr.rel (%p112) target = $region28
    $region27: #{lambda_layer.1} parent=5 // pred_region
      %s116 = ssub.s32 %s8, 1
      %p117 = scmp.lt.s32.totalorder %s13, 1
      %s118 = scalar_select %p117, %s13, 1
      %s119 = smul.addr %s118, 8
      %s120 = scalar_lea.vmem %s0, %s119
      %p121 = pneg %p34
      %p122 = pneg %p31
      %p123 = pneg %p55
      %p124 = pneg %p52
      %p125 = pneg %p81
      %p126 = pneg %p78
      %p127 = scmp.lt.s32.totalorder %s13, 1
      %s128 = scalar_select %p127, %s13, 1
      %s129 = smul.addr %s128, 4
      %s130 = scalar_lea.vmem %s2, %s129
      %p131 = scmp.lt.s32.totalorder %s13, 1
      %s132 = scalar_select %p131, %s13, 1
      %s133 = smul.addr %s132, 8
      %s134 = scalar_lea.vmem %s0, %s133
      %p135 = scmp.lt.s32.totalorder %s13, 1
      %s136 = scalar_select %p135, %s13, 1
      %s137 = smul.addr %s136, 4
      %s138 = scalar_lea.vmem %s2, %s137
      %v139 = vlaneseq
      %vm140 = vcmp.ge.s32.totalorder %v139, 0
      %vm141 = vcmp.lt.s32.totalorder %v139, 128
      %vm142 = vmand %vm140, %vm141
      %143 = vst.msk [vmem:[%s138] sm:$0x1] %vm142, 0.0
      %144 = vst.msk [vmem:[%s138 + $0x3] sm:$0x1] %vm142, 0.0
      %v145 = vld [vmem:[%s134] sm:$0xff]
      %v146 = vld [vmem:[%s1] sm:$0xff]
      %v147 = vld [vmem:[%s1 + $0x8] sm:$0xff]
      %v148 = vld [vmem:[%s1 + $0x10] sm:$0xff]
      %v149 = vld [vmem:[%s1 + $0x18] sm:$0xff]
      %v150 = vld [vmem:[%s1 + $0x20] sm:$0xff]
      %v151 = vld [vmem:[%s1 + $0x28] sm:$0xff]
      %v152 = vld [vmem:[%s1 + $0x30] sm:$0xff]
      %v153 = vld [vmem:[%s1 + $0x38] sm:$0xff]
      %v154 = vld [vmem:[%s1 + $0x40] sm:$0xff]
      %v155 = vld [vmem:[%s1 + $0x48] sm:$0xff]
      %v156 = vld [vmem:[%s1 + $0x50] sm:$0xff]
      %v157 = vld [vmem:[%s1 + $0x58] sm:$0xff]
      %v158 = vld [vmem:[%s1 + $0x60] sm:$0xff]
      %v159 = vld [vmem:[%s1 + $0x68] sm:$0xff]
      %v160 = vld [vmem:[%s1 + $0x70] sm:$0xff]
      %v161 = vld [vmem:[%s1 + $0x78] sm:$0xff]
      %v162 = vld [vmem:[%s1 + $0x80] sm:$0xff]
      %v163 = vld [vmem:[%s1 + $0x88] sm:$0xff]
      %v164 = vld [vmem:[%s1 + $0x90] sm:$0xff]
      %v165 = vld [vmem:[%s1 + $0x98] sm:$0xff]
      %v166 = vld [vmem:[%s1 + $0xa0] sm:$0xff]
      %v167 = vld [vmem:[%s1 + $0xa8] sm:$0xff]
      %v168 = vld [vmem:[%s1 + $0xb0] sm:$0xff]
      %v169 = vld [vmem:[%s1 + $0xb8] sm:$0xff]
      %v170 = vld [vmem:[%s1 + $0xc0] sm:$0xff]
      %v171 = vld [vmem:[%s1 + $0xc8] sm:$0xff]
      %v172 = vld [vmem:[%s1 + $0xd0] sm:$0xff]
      %v173 = vld [vmem:[%s1 + $0xd8] sm:$0xff]
      %v174 = vld [vmem:[%s1 + $0xe0] sm:$0xff]
      %v175 = vld [vmem:[%s1 + $0xe8] sm:$0xff]
      %v176 = vld [vmem:[%s1 + $0xf0] sm:$0xff]
      %v177 = vld [vmem:[%s1 + $0xf8] sm:$0xff]
      %v178 = vld [vmem:[%s1 + $0x100] sm:$0xff]
      %v179 = vld [vmem:[%s1 + $0x108] sm:$0xff]
      %v180 = vld [vmem:[%s1 + $0x110] sm:$0xff]
      %v181 = vld [vmem:[%s1 + $0x118] sm:$0xff]
      %v182 = vld [vmem:[%s1 + $0x120] sm:$0xff]
      %v183 = vld [vmem:[%s1 + $0x128] sm:$0xff]
      %v184 = vld [vmem:[%s1 + $0x130] sm:$0xff]
      %v185 = vld [vmem:[%s1 + $0x138] sm:$0xff]
      %v186 = vld [vmem:[%s1 + $0x140] sm:$0xff]
      %v187 = vld [vmem:[%s1 + $0x148] sm:$0xff]
      %v188 = vld [vmem:[%s1 + $0x150] sm:$0xff]
      %v189 = vld [vmem:[%s1 + $0x158] sm:$0xff]
      %v190 = vld [vmem:[%s1 + $0x160] sm:$0xff]
      %v191 = vld [vmem:[%s1 + $0x168] sm:$0xff]
      %v192 = vld [vmem:[%s1 + $0x170] sm:$0xff]
      %v193 = vld [vmem:[%s1 + $0x178] sm:$0xff]
      %v194 = vld [vmem:[%s1 + $0x180] sm:$0xff]
      %v195 = vld [vmem:[%s1 + $0x188] sm:$0xff]
      %v196 = vld [vmem:[%s1 + $0x190] sm:$0xff]
      %v197 = vld [vmem:[%s1 + $0x198] sm:$0xff]
      %v198 = vld [vmem:[%s1 + $0x1a0] sm:$0xff]
      %v199 = vld [vmem:[%s1 + $0x1a8] sm:$0xff]
      %v200 = vld [vmem:[%s1 + $0x1b0] sm:$0xff]
      %v201 = vld [vmem:[%s1 + $0x1b8] sm:$0xff]
      %v202 = vld [vmem:[%s1 + $0x1c0] sm:$0xff]
      %v203 = vld [vmem:[%s1 + $0x1c8] sm:$0xff]
      %v204 = vld [vmem:[%s1 + $0x1d0] sm:$0xff]
      %v205 = vld [vmem:[%s1 + $0x1d8] sm:$0xff]
      %v206 = vld [vmem:[%s1 + $0x1e0] sm:$0xff]
      %v207 = vld [vmem:[%s1 + $0x1e8] sm:$0xff]
      %v208 = vld [vmem:[%s1 + $0x1f0] sm:$0xff]
      %v209 = vld [vmem:[%s1 + $0x1f8] sm:$0xff]
      %v210 = vld [vmem:[%s1 + $0x200] sm:$0xff]
      %v211 = vld [vmem:[%s1 + $0x208] sm:$0xff]
      %v212 = vld [vmem:[%s1 + $0x210] sm:$0xff]
      %v213 = vld [vmem:[%s1 + $0x218] sm:$0xff]
      %v214 = vld [vmem:[%s1 + $0x220] sm:$0xff]
      %v215 = vld [vmem:[%s1 + $0x228] sm:$0xff]
      %v216 = vld [vmem:[%s1 + $0x230] sm:$0xff]
      %v217 = vld [vmem:[%s1 + $0x238] sm:$0xff]
      %v218 = vld [vmem:[%s1 + $0x240] sm:$0xff]
      %v219 = vld [vmem:[%s1 + $0x248] sm:$0xff]
      %v220 = vld [vmem:[%s1 + $0x250] sm:$0xff]
      %v221 = vld [vmem:[%s1 + $0x258] sm:$0xff]
      %v222 = vld [vmem:[%s1 + $0x260] sm:$0xff]
      %v223 = vld [vmem:[%s1 + $0x268] sm:$0xff]
      %v224 = vld [vmem:[%s1 + $0x270] sm:$0xff]
      %v225 = vld [vmem:[%s1 + $0x278] sm:$0xff]
      %v226 = vld [vmem:[%s1 + $0x280] sm:$0xff]
      %v227 = vld [vmem:[%s1 + $0x288] sm:$0xff]
      %v228 = vld [vmem:[%s1 + $0x290] sm:$0xff]
      %v229 = vld [vmem:[%s1 + $0x298] sm:$0xff]
      %v230 = vld [vmem:[%s1 + $0x2a0] sm:$0xff]
      %v231 = vld [vmem:[%s1 + $0x2a8] sm:$0xff]
      %v232 = vld [vmem:[%s1 + $0x2b0] sm:$0xff]
      %v233 = vld [vmem:[%s1 + $0x2b8] sm:$0xff]
      %v234 = vld [vmem:[%s1 + $0x2c0] sm:$0xff]
      %v235 = vld [vmem:[%s1 + $0x2c8] sm:$0xff]
      %v236 = vld [vmem:[%s1 + $0x2d0] sm:$0xff]
      %v237 = vld [vmem:[%s1 + $0x2d8] sm:$0xff]
      %v238 = vld [vmem:[%s1 + $0x2e0] sm:$0xff]
      %v239 = vld [vmem:[%s1 + $0x2e8] sm:$0xff]
      %v240 = vld [vmem:[%s1 + $0x2f0] sm:$0xff]
      %v241 = vld [vmem:[%s1 + $0x2f8] sm:$0xff]
      %v242 = vld [vmem:[%s1 + $0x300] sm:$0xff]
      %v243 = vld [vmem:[%s1 + $0x308] sm:$0xff]
      %v244 = vld [vmem:[%s1 + $0x310] sm:$0xff]
      %v245 = vld [vmem:[%s1 + $0x318] sm:$0xff]
      %v246 = vld [vmem:[%s1 + $0x320] sm:$0xff]
      %v247 = vld [vmem:[%s1 + $0x328] sm:$0xff]
      %v248 = vld [vmem:[%s1 + $0x330] sm:$0xff]
      %v249 = vld [vmem:[%s1 + $0x338] sm:$0xff]
      %v250 = vld [vmem:[%s1 + $0x340] sm:$0xff]
      %v251 = vld [vmem:[%s1 + $0x348] sm:$0xff]
      %v252 = vld [vmem:[%s1 + $0x350] sm:$0xff]
      %v253 = vld [vmem:[%s1 + $0x358] sm:$0xff]
      %v254 = vld [vmem:[%s1 + $0x360] sm:$0xff]
      %v255 = vld [vmem:[%s1 + $0x368] sm:$0xff]
      %v256 = vld [vmem:[%s1 + $0x370] sm:$0xff]
      %v257 = vld [vmem:[%s1 + $0x378] sm:$0xff]
      %v258 = vld [vmem:[%s1 + $0x380] sm:$0xff]
      %v259 = vld [vmem:[%s1 + $0x388] sm:$0xff]
      %v260 = vld [vmem:[%s1 + $0x390] sm:$0xff]
      %v261 = vld [vmem:[%s1 + $0x398] sm:$0xff]
      %v262 = vld [vmem:[%s1 + $0x3a0] sm:$0xff]
      %v263 = vld [vmem:[%s1 + $0x3a8] sm:$0xff]
      %v264 = vld [vmem:[%s1 + $0x3b0] sm:$0xff]
      %v265 = vld [vmem:[%s1 + $0x3b8] sm:$0xff]
      %v266 = vld [vmem:[%s1 + $0x3c0] sm:$0xff]
      %v267 = vld [vmem:[%s1 + $0x3c8] sm:$0xff]
      %v268 = vld [vmem:[%s1 + $0x3d0] sm:$0xff]
      %v269 = vld [vmem:[%s1 + $0x3d8] sm:$0xff]
      %v270 = vld [vmem:[%s1 + $0x3e0] sm:$0xff]
      %v271 = vld [vmem:[%s1 + $0x3e8] sm:$0xff]
      %v272 = vld [vmem:[%s1 + $0x3f0] sm:$0xff]
      %v273 = vld [vmem:[%s1 + $0x3f8] sm:$0xff]
      %v274 = vunpack.c.l.bf16 %v146
      %v275 = vunpack.c.h.bf16 %v146
      %v276 = vunpack.c.l.bf16 %v147
      %v277 = vunpack.c.h.bf16 %v147
      %v278 = vunpack.c.l.bf16 %v148
      %v279 = vunpack.c.h.bf16 %v148
      %v280 = vunpack.c.l.bf16 %v149
      %v281 = vunpack.c.h.bf16 %v149
      %v282 = vunpack.c.l.bf16 %v150
      %v283 = vunpack.c.h.bf16 %v150
      %v284 = vunpack.c.l.bf16 %v151
      %v285 = vunpack.c.h.bf16 %v151
      %v286 = vunpack.c.l.bf16 %v152
      %v287 = vunpack.c.h.bf16 %v152
      %v288 = vunpack.c.l.bf16 %v153
      %v289 = vunpack.c.h.bf16 %v153
      %v290 = vunpack.c.l.bf16 %v154
      %v291 = vunpack.c.h.bf16 %v154
      %v292 = vunpack.c.l.bf16 %v155
      %v293 = vunpack.c.h.bf16 %v155
      %v294 = vunpack.c.l.bf16 %v156
      %v295 = vunpack.c.h.bf16 %v156
      %v296 = vunpack.c.l.bf16 %v157
      %v297 = vunpack.c.h.bf16 %v157
      %v298 = vunpack.c.l.bf16 %v158
      %v299 = vunpack.c.h.bf16 %v158
      %v300 = vunpack.c.l.bf16 %v159
      %v301 = vunpack.c.h.bf16 %v159
      %v302 = vunpack.c.l.bf16 %v160
      %v303 = vunpack.c.h.bf16 %v160
      %v304 = vunpack.c.l.bf16 %v161
      %v305 = vunpack.c.h.bf16 %v161
      %v306 = vunpack.c.l.bf16 %v162
      %v307 = vunpack.c.h.bf16 %v162
      %v308 = vunpack.c.l.bf16 %v163
      %v309 = vunpack.c.h.bf16 %v163
      %v310 = vunpack.c.l.bf16 %v164
      %v311 = vunpack.c.h.bf16 %v164
      %v312 = vunpack.c.l.bf16 %v165
      %v313 = vunpack.c.h.bf16 %v165
      %v314 = vunpack.c.l.bf16 %v166
      %v315 = vunpack.c.h.bf16 %v166
      %v316 = vunpack.c.l.bf16 %v167
      %v317 = vunpack.c.h.bf16 %v167
      %v318 = vunpack.c.l.bf16 %v168
      %v319 = vunpack.c.h.bf16 %v168
      %v320 = vunpack.c.l.bf16 %v169
      %v321 = vunpack.c.h.bf16 %v169
      %v322 = vunpack.c.l.bf16 %v170
      %v323 = vunpack.c.h.bf16 %v170
      %v324 = vunpack.c.l.bf16 %v171
      %v325 = vunpack.c.h.bf16 %v171
      %v326 = vunpack.c.l.bf16 %v172
      %v327 = vunpack.c.h.bf16 %v172
      %v328 = vunpack.c.l.bf16 %v173
      %v329 = vunpack.c.h.bf16 %v173
      %v330 = vunpack.c.l.bf16 %v174
      %v331 = vunpack.c.h.bf16 %v174
      %v332 = vunpack.c.l.bf16 %v175
      %v333 = vunpack.c.h.bf16 %v175
      %v334 = vunpack.c.l.bf16 %v176
      %v335 = vunpack.c.h.bf16 %v176
      %v336 = vunpack.c.l.bf16 %v177
      %v337 = vunpack.c.h.bf16 %v177
      %v338 = vunpack.c.l.bf16 %v178
      %v339 = vunpack.c.h.bf16 %v178
      %v340 = vunpack.c.l.bf16 %v179
      %v341 = vunpack.c.h.bf16 %v179
      %v342 = vunpack.c.l.bf16 %v180
      %v343 = vunpack.c.h.bf16 %v180
      %v344 = vunpack.c.l.bf16 %v181
      %v345 = vunpack.c.h.bf16 %v181
      %v346 = vunpack.c.l.bf16 %v182
      %v347 = vunpack.c.h.bf16 %v182
      %v348 = vunpack.c.l.bf16 %v183
      %v349 = vunpack.c.h.bf16 %v183
      %v350 = vunpack.c.l.bf16 %v184
      %v351 = vunpack.c.h.bf16 %v184
      %v352 = vunpack.c.l.bf16 %v185
      %v353 = vunpack.c.h.bf16 %v185
      %v354 = vunpack.c.l.bf16 %v186
      %v355 = vunpack.c.h.bf16 %v186
      %v356 = vunpack.c.l.bf16 %v187
      %v357 = vunpack.c.h.bf16 %v187
      %v358 = vunpack.c.l.bf16 %v188
      %v359 = vunpack.c.h.bf16 %v188
      %v360 = vunpack.c.l.bf16 %v189
      %v361 = vunpack.c.h.bf16 %v189
      %v362 = vunpack.c.l.bf16 %v190
      %v363 = vunpack.c.h.bf16 %v190
      %v364 = vunpack.c.l.bf16 %v191
      %v365 = vunpack.c.h.bf16 %v191
      %v366 = vunpack.c.l.bf16 %v192
      %v367 = vunpack.c.h.bf16 %v192
      %v368 = vunpack.c.l.bf16 %v193
      %v369 = vunpack.c.h.bf16 %v193
      %v370 = vunpack.c.l.bf16 %v194
      %v371 = vunpack.c.h.bf16 %v194
      %v372 = vunpack.c.l.bf16 %v195
      %v373 = vunpack.c.h.bf16 %v195
      %v374 = vunpack.c.l.bf16 %v196
      %v375 = vunpack.c.h.bf16 %v196
      %v376 = vunpack.c.l.bf16 %v197
      %v377 = vunpack.c.h.bf16 %v197
      %v378 = vunpack.c.l.bf16 %v198
      %v379 = vunpack.c.h.bf16 %v198
      %v380 = vunpack.c.l.bf16 %v199
      %v381 = vunpack.c.h.bf16 %v199
      %v382 = vunpack.c.l.bf16 %v200
      %v383 = vunpack.c.h.bf16 %v200
      %v384 = vunpack.c.l.bf16 %v201
      %v385 = vunpack.c.h.bf16 %v201
      %v386 = vunpack.c.l.bf16 %v202
      %v387 = vunpack.c.h.bf16 %v202
      %v388 = vunpack.c.l.bf16 %v203
      %v389 = vunpack.c.h.bf16 %v203
      %v390 = vunpack.c.l.bf16 %v204
      %v391 = vunpack.c.h.bf16 %v204
      %v392 = vunpack.c.l.bf16 %v205
      %v393 = vunpack.c.h.bf16 %v205
      %v394 = vunpack.c.l.bf16 %v206
      %v395 = vunpack.c.h.bf16 %v206
      %v396 = vunpack.c.l.bf16 %v207
      %v397 = vunpack.c.h.bf16 %v207
      %v398 = vunpack.c.l.bf16 %v208
      %v399 = vunpack.c.h.bf16 %v208
      %v400 = vunpack.c.l.bf16 %v209
      %v401 = vunpack.c.h.bf16 %v209
      %v402 = vunpack.c.l.bf16 %v210
      %v403 = vunpack.c.h.bf16 %v210
      %v404 = vunpack.c.l.bf16 %v211
      %v405 = vunpack.c.h.bf16 %v211
      %v406 = vunpack.c.l.bf16 %v212
      %v407 = vunpack.c.h.bf16 %v212
      %v408 = vunpack.c.l.bf16 %v213
      %v409 = vunpack.c.h.bf16 %v213
      %v410 = vunpack.c.l.bf16 %v214
      %v411 = vunpack.c.h.bf16 %v214
      %v412 = vunpack.c.l.bf16 %v215
      %v413 = vunpack.c.h.bf16 %v215
      %v414 = vunpack.c.l.bf16 %v216
      %v415 = vunpack.c.h.bf16 %v216
      %v416 = vunpack.c.l.bf16 %v217
      %v417 = vunpack.c.h.bf16 %v217
      %v418 = vunpack.c.l.bf16 %v218
      %v419 = vunpack.c.h.bf16 %v218
      %v420 = vunpack.c.l.bf16 %v219
      %v421 = vunpack.c.h.bf16 %v219
      %v422 = vunpack.c.l.bf16 %v220
      %v423 = vunpack.c.h.bf16 %v220
      %v424 = vunpack.c.l.bf16 %v221
      %v425 = vunpack.c.h.bf16 %v221
      %v426 = vunpack.c.l.bf16 %v222
      %v427 = vunpack.c.h.bf16 %v222
      %v428 = vunpack.c.l.bf16 %v223
      %v429 = vunpack.c.h.bf16 %v223
      %v430 = vunpack.c.l.bf16 %v224
      %v431 = vunpack.c.h.bf16 %v224
      %v432 = vunpack.c.l.bf16 %v225
      %v433 = vunpack.c.h.bf16 %v225
      %v434 = vunpack.c.l.bf16 %v226
      %v435 = vunpack.c.h.bf16 %v226
      %v436 = vunpack.c.l.bf16 %v227
      %v437 = vunpack.c.h.bf16 %v227
      %v438 = vunpack.c.l.bf16 %v228
      %v439 = vunpack.c.h.bf16 %v228
      %v440 = vunpack.c.l.bf16 %v229
      %v441 = vunpack.c.h.bf16 %v229
      %v442 = vunpack.c.l.bf16 %v230
      %v443 = vunpack.c.h.bf16 %v230
      %v444 = vunpack.c.l.bf16 %v231
      %v445 = vunpack.c.h.bf16 %v231
      %v446 = vunpack.c.l.bf16 %v232
      %v447 = vunpack.c.h.bf16 %v232
      %v448 = vunpack.c.l.bf16 %v233
      %v449 = vunpack.c.h.bf16 %v233
      %v450 = vunpack.c.l.bf16 %v234
      %v451 = vunpack.c.h.bf16 %v234
      %v452 = vunpack.c.l.bf16 %v235
      %v453 = vunpack.c.h.bf16 %v235
      %v454 = vunpack.c.l.bf16 %v236
      %v455 = vunpack.c.h.bf16 %v236
      %v456 = vunpack.c.l.bf16 %v237
      %v457 = vunpack.c.h.bf16 %v237
      %v458 = vunpack.c.l.bf16 %v238
      %v459 = vunpack.c.h.bf16 %v238
      %v460 = vunpack.c.l.bf16 %v239
      %v461 = vunpack.c.h.bf16 %v239
      %v462 = vunpack.c.l.bf16 %v240
      %v463 = vunpack.c.h.bf16 %v240
      %v464 = vunpack.c.l.bf16 %v241
      %v465 = vunpack.c.h.bf16 %v241
      %v466 = vunpack.c.l.bf16 %v242
      %v467 = vunpack.c.h.bf16 %v242
      %v468 = vunpack.c.l.bf16 %v243
      %v469 = vunpack.c.h.bf16 %v243
      %v470 = vunpack.c.l.bf16 %v244
      %v471 = vunpack.c.h.bf16 %v244
      %v472 = vunpack.c.l.bf16 %v245
      %v473 = vunpack.c.h.bf16 %v245
      %v474 = vunpack.c.l.bf16 %v246
      %v475 = vunpack.c.h.bf16 %v246
      %v476 = vunpack.c.l.bf16 %v247
      %v477 = vunpack.c.h.bf16 %v247
      %v478 = vunpack.c.l.bf16 %v248
      %v479 = vunpack.c.h.bf16 %v248
      %v480 = vunpack.c.l.bf16 %v249
      %v481 = vunpack.c.h.bf16 %v249
      %v482 = vunpack.c.l.bf16 %v250
      %v483 = vunpack.c.h.bf16 %v250
      %v484 = vunpack.c.l.bf16 %v251
      %v485 = vunpack.c.h.bf16 %v251
      %v486 = vunpack.c.l.bf16 %v252
      %v487 = vunpack.c.h.bf16 %v252
      %v488 = vunpack.c.l.bf16 %v253
      %v489 = vunpack.c.h.bf16 %v253
      %v490 = vunpack.c.l.bf16 %v254
      %v491 = vunpack.c.h.bf16 %v254
      %v492 = vunpack.c.l.bf16 %v255
      %v493 = vunpack.c.h.bf16 %v255
      %v494 = vunpack.c.l.bf16 %v256
      %v495 = vunpack.c.h.bf16 %v256
      %v496 = vunpack.c.l.bf16 %v257
      %v497 = vunpack.c.h.bf16 %v257
      %v498 = vunpack.c.l.bf16 %v258
      %v499 = vunpack.c.h.bf16 %v258
      %v500 = vunpack.c.l.bf16 %v259
      %v501 = vunpack.c.h.bf16 %v259
      %v502 = vunpack.c.l.bf16 %v260
      %v503 = vunpack.c.h.bf16 %v260
      %v504 = vunpack.c.l.bf16 %v261
      %v505 = vunpack.c.h.bf16 %v261
      %v506 = vunpack.c.l.bf16 %v262
      %v507 = vunpack.c.h.bf16 %v262
      %v508 = vunpack.c.l.bf16 %v263
      %v509 = vunpack.c.h.bf16 %v263
      %v510 = vunpack.c.l.bf16 %v264
      %v511 = vunpack.c.h.bf16 %v264
      %v512 = vunpack.c.l.bf16 %v265
      %v513 = vunpack.c.h.bf16 %v265
      %v514 = vunpack.c.l.bf16 %v266
      %v515 = vunpack.c.h.bf16 %v266
      %v516 = vunpack.c.l.bf16 %v267
      %v517 = vunpack.c.h.bf16 %v267
      %v518 = vunpack.c.l.bf16 %v268
      %v519 = vunpack.c.h.bf16 %v268
      %v520 = vunpack.c.l.bf16 %v269
      %v521 = vunpack.c.h.bf16 %v269
      %v522 = vunpack.c.l.bf16 %v270
      %v523 = vunpack.c.h.bf16 %v270
      %v524 = vunpack.c.l.bf16 %v271
      %v525 = vunpack.c.h.bf16 %v271
      %v526 = vunpack.c.l.bf16 %v272
      %v527 = vunpack.c.h.bf16 %v272
      %v528 = vunpack.c.l.bf16 %v273
      %v529 = vunpack.c.h.bf16 %v273
      %v531 = vlaneseq
      %v532 = vshrl.u32 %v531, 7
      %v533 = vsub.s32 0, %v532
      %v534 = vrot.slane %v145, %v533
      %v535 = vlaneseq
      %v536 = vshrl.u32 %v535, 7
      %v537 = vsub.s32 1, %v536
      %v538 = vrot.slane %v145, %v537
      %v539 = vlaneseq
      %v540 = vshrl.u32 %v539, 7
      %v541 = vsub.s32 2, %v540
      %v542 = vrot.slane %v145, %v541
      %v543 = vlaneseq
      %v544 = vshrl.u32 %v543, 7
      %v545 = vsub.s32 3, %v544
      %v546 = vrot.slane %v145, %v545
      %v547 = vlaneseq
      %v548 = vshrl.u32 %v547, 7
      %v549 = vsub.s32 4, %v548
      %v550 = vrot.slane %v145, %v549
      %v551 = vlaneseq
      %v552 = vshrl.u32 %v551, 7
      %v553 = vsub.s32 5, %v552
      %v554 = vrot.slane %v145, %v553
      %v555 = vlaneseq
      %v556 = vshrl.u32 %v555, 7
      %v557 = vsub.s32 6, %v556
      %v558 = vrot.slane %v145, %v557
      %v559 = vlaneseq
      %v560 = vshrl.u32 %v559, 7
      %v561 = vsub.s32 7, %v560
      %v562 = vrot.slane %v145, %v561
      %571 = vmatprep.subr.mxu0 %v275
      %572 = vmatpush1.msra.mxu0 %v274
      %573 = vmatprep.subr.mxu0 %v277
      %574 = vmatpush1.msra.mxu0 %v276
      %575 = vmatprep.subr.mxu0 %v279
      %576 = vmatpush1.msra.mxu0 %v278
      %577 = vmatprep.subr.mxu0 %v281
      %578 = vmatpush1.msra.mxu0 %v280
      %579 = vmatprep.subr.mxu0 %v283
      %580 = vmatpush1.msra.mxu0 %v282
      %581 = vmatprep.subr.mxu0 %v285
      %582 = vmatpush1.msra.mxu0 %v284
      %583 = vmatprep.subr.mxu0 %v287
      %584 = vmatpush1.msra.mxu0 %v286
      %585 = vmatprep.subr.mxu0 %v289
      %586 = vmatpush1.msra.mxu0 %v288
      %587 = vmatprep.subr.mxu0 %v291
      %588 = vmatpush1.msra.mxu0 %v290
      %589 = vmatprep.subr.mxu0 %v293
      %590 = vmatpush1.msra.mxu0 %v292
      %591 = vmatprep.subr.mxu0 %v295
      %592 = vmatpush1.msra.mxu0 %v294
      %593 = vmatprep.subr.mxu0 %v297
      %594 = vmatpush1.msra.mxu0 %v296
      %595 = vmatprep.subr.mxu0 %v299
      %596 = vmatpush1.msra.mxu0 %v298
      %597 = vmatprep.subr.mxu0 %v301
      %598 = vmatpush1.msra.mxu0 %v300
      %599 = vmatprep.subr.mxu0 %v303
      %600 = vmatpush1.msra.mxu0 %v302
      %601 = vmatprep.subr.mxu0 %v305
      %602 = vmatpush1.msra.mxu0 %v304
      %603 = vmatprep.subr.mxu0 %v307
      %604 = vmatpush1.msra.mxu0 %v306
      %605 = vmatprep.subr.mxu0 %v309
      %606 = vmatpush1.msra.mxu0 %v308
      %607 = vmatprep.subr.mxu0 %v311
      %608 = vmatpush1.msra.mxu0 %v310
      %609 = vmatprep.subr.mxu0 %v313
      %610 = vmatpush1.msra.mxu0 %v312
      %611 = vmatprep.subr.mxu0 %v315
      %612 = vmatpush1.msra.mxu0 %v314
      %613 = vmatprep.subr.mxu0 %v317
      %614 = vmatpush1.msra.mxu0 %v316
      %615 = vmatprep.subr.mxu0 %v319
      %616 = vmatpush1.msra.mxu0 %v318
      %617 = vmatprep.subr.mxu0 %v321
      %618 = vmatpush1.msra.mxu0 %v320
      %619 = vmatprep.subr.mxu0 %v323
      %620 = vmatpush1.msra.mxu0 %v322
      %621 = vmatprep.subr.mxu0 %v325
      %622 = vmatpush1.msra.mxu0 %v324
      %623 = vmatprep.subr.mxu0 %v327
      %624 = vmatpush1.msra.mxu0 %v326
      %625 = vmatprep.subr.mxu0 %v329
      %626 = vmatpush1.msra.mxu0 %v328
      %627 = vmatprep.subr.mxu0 %v331
      %628 = vmatpush1.msra.mxu0 %v330
      %629 = vmatprep.subr.mxu0 %v333
      %630 = vmatpush1.msra.mxu0 %v332
      %631 = vmatprep.subr.mxu0 %v335
      %632 = vmatpush1.msra.mxu0 %v334
      %633 = vmatprep.subr.mxu0 %v337
      %634 = vmatpush1.msra.mxu0 %v336
      %635 = vmatprep.mubr.f32.mxu0 %v538
      %636 = vmatmul.mubr.f32.gmra.mrb[0].mxu0 %v534
      %v637 = vpop.f32.mrb[0].mxu0
      %v638 = vadd.f32 0.0, %v637
      %v639 = vpop.f32.mrb[0].mxu0
      %v640 = vadd.f32 0.0, %v639
      %641 = vdwg.mxu0
      %642 = vmatprep.subr.mxu0 %v339
      %643 = vmatpush1.msra.mxu0 %v338
      %644 = vmatprep.subr.mxu0 %v341
      %645 = vmatpush1.msra.mxu0 %v340
      %646 = vmatprep.subr.mxu0 %v343
      %647 = vmatpush1.msra.mxu0 %v342
      %648 = vmatprep.subr.mxu0 %v345
      %649 = vmatpush1.msra.mxu0 %v344
      %650 = vmatprep.subr.mxu0 %v347
      %651 = vmatpush1.msra.mxu0 %v346
      %652 = vmatprep.subr.mxu0 %v349
      %653 = vmatpush1.msra.mxu0 %v348
      %654 = vmatprep.subr.mxu0 %v351
      %655 = vmatpush1.msra.mxu0 %v350
      %656 = vmatprep.subr.mxu0 %v353
      %657 = vmatpush1.msra.mxu0 %v352
      %658 = vmatprep.subr.mxu0 %v355
      %659 = vmatpush1.msra.mxu0 %v354
      %660 = vmatprep.subr.mxu0 %v357
      %661 = vmatpush1.msra.mxu0 %v356
      %662 = vmatprep.subr.mxu0 %v359
      %663 = vmatpush1.msra.mxu0 %v358
      %664 = vmatprep.subr.mxu0 %v361
      %665 = vmatpush1.msra.mxu0 %v360
      %666 = vmatprep.subr.mxu0 %v363
      %667 = vmatpush1.msra.mxu0 %v362
      %668 = vmatprep.subr.mxu0 %v365
      %669 = vmatpush1.msra.mxu0 %v364
      %670 = vmatprep.subr.mxu0 %v367
      %671 = vmatpush1.msra.mxu0 %v366
      %672 = vmatprep.subr.mxu0 %v369
      %673 = vmatpush1.msra.mxu0 %v368
      %674 = vmatprep.subr.mxu0 %v371
      %675 = vmatpush1.msra.mxu0 %v370
      %676 = vmatprep.subr.mxu0 %v373
      %677 = vmatpush1.msra.mxu0 %v372
      %678 = vmatprep.subr.mxu0 %v375
      %679 = vmatpush1.msra.mxu0 %v374
      %680 = vmatprep.subr.mxu0 %v377
      %681 = vmatpush1.msra.mxu0 %v376
      %682 = vmatprep.subr.mxu0 %v379
      %683 = vmatpush1.msra.mxu0 %v378
      %684 = vmatprep.subr.mxu0 %v381
      %685 = vmatpush1.msra.mxu0 %v380
      %686 = vmatprep.subr.mxu0 %v383
      %687 = vmatpush1.msra.mxu0 %v382
      %688 = vmatprep.subr.mxu0 %v385
      %689 = vmatpush1.msra.mxu0 %v384
      %690 = vmatprep.subr.mxu0 %v387
      %691 = vmatpush1.msra.mxu0 %v386
      %692 = vmatprep.subr.mxu0 %v389
      %693 = vmatpush1.msra.mxu0 %v388
      %694 = vmatprep.subr.mxu0 %v391
      %695 = vmatpush1.msra.mxu0 %v390
      %696 = vmatprep.subr.mxu0 %v393
      %697 = vmatpush1.msra.mxu0 %v392
      %698 = vmatprep.subr.mxu0 %v395
      %699 = vmatpush1.msra.mxu0 %v394
      %700 = vmatprep.subr.mxu0 %v397
      %701 = vmatpush1.msra.mxu0 %v396
      %702 = vmatprep.subr.mxu0 %v399
      %703 = vmatpush1.msra.mxu0 %v398
      %704 = vmatprep.subr.mxu0 %v401
      %705 = vmatpush1.msra.mxu0 %v400
      %706 = vmatprep.mubr.f32.mxu0 %v546
      %707 = vmatmul.mubr.f32.gmra.mrb[0].mxu0 %v542
      %v708 = vpop.f32.mrb[0].mxu0
      %v709 = vadd.f32 %v638, %v708
      %v710 = vpop.f32.mrb[0].mxu0
      %v711 = vadd.f32 %v640, %v710
      %712 = vdwg.mxu0
      %713 = vmatprep.subr.mxu0 %v403
      %714 = vmatpush1.msra.mxu0 %v402
      %715 = vmatprep.subr.mxu0 %v405
      %716 = vmatpush1.msra.mxu0 %v404
      %717 = vmatprep.subr.mxu0 %v407
      %718 = vmatpush1.msra.mxu0 %v406
      %719 = vmatprep.subr.mxu0 %v409
      %720 = vmatpush1.msra.mxu0 %v408
      %721 = vmatprep.subr.mxu0 %v411
      %722 = vmatpush1.msra.mxu0 %v410
      %723 = vmatprep.subr.mxu0 %v413
      %724 = vmatpush1.msra.mxu0 %v412
      %725 = vmatprep.subr.mxu0 %v415
      %726 = vmatpush1.msra.mxu0 %v414
      %727 = vmatprep.subr.mxu0 %v417
      %728 = vmatpush1.msra.mxu0 %v416
      %729 = vmatprep.subr.mxu0 %v419
      %730 = vmatpush1.msra.mxu0 %v418
      %731 = vmatprep.subr.mxu0 %v421
      %732 = vmatpush1.msra.mxu0 %v420
      %733 = vmatprep.subr.mxu0 %v423
      %734 = vmatpush1.msra.mxu0 %v422
      %735 = vmatprep.subr.mxu0 %v425
      %736 = vmatpush1.msra.mxu0 %v424
      %737 = vmatprep.subr.mxu0 %v427
      %738 = vmatpush1.msra.mxu0 %v426
      %739 = vmatprep.subr.mxu0 %v429
      %740 = vmatpush1.msra.mxu0 %v428
      %741 = vmatprep.subr.mxu0 %v431
      %742 = vmatpush1.msra.mxu0 %v430
      %743 = vmatprep.subr.mxu0 %v433
      %744 = vmatpush1.msra.mxu0 %v432
      %745 = vmatprep.subr.mxu0 %v435
      %746 = vmatpush1.msra.mxu0 %v434
      %747 = vmatprep.subr.mxu0 %v437
      %748 = vmatpush1.msra.mxu0 %v436
      %749 = vmatprep.subr.mxu0 %v439
      %750 = vmatpush1.msra.mxu0 %v438
      %751 = vmatprep.subr.mxu0 %v441
      %752 = vmatpush1.msra.mxu0 %v440
      %753 = vmatprep.subr.mxu0 %v443
      %754 = vmatpush1.msra.mxu0 %v442
      %755 = vmatprep.subr.mxu0 %v445
      %756 = vmatpush1.msra.mxu0 %v444
      %757 = vmatprep.subr.mxu0 %v447
      %758 = vmatpush1.msra.mxu0 %v446
      %759 = vmatprep.subr.mxu0 %v449
      %760 = vmatpush1.msra.mxu0 %v448
      %761 = vmatprep.subr.mxu0 %v451
      %762 = vmatpush1.msra.mxu0 %v450
      %763 = vmatprep.subr.mxu0 %v453
      %764 = vmatpush1.msra.mxu0 %v452
      %765 = vmatprep.subr.mxu0 %v455
      %766 = vmatpush1.msra.mxu0 %v454
      %767 = vmatprep.subr.mxu0 %v457
      %768 = vmatpush1.msra.mxu0 %v456
      %769 = vmatprep.subr.mxu0 %v459
      %770 = vmatpush1.msra.mxu0 %v458
      %771 = vmatprep.subr.mxu0 %v461
      %772 = vmatpush1.msra.mxu0 %v460
      %773 = vmatprep.subr.mxu0 %v463
      %774 = vmatpush1.msra.mxu0 %v462
      %775 = vmatprep.subr.mxu0 %v465
      %776 = vmatpush1.msra.mxu0 %v464
      %777 = vmatprep.mubr.f32.mxu0 %v554
      %778 = vmatmul.mubr.f32.gmra.mrb[0].mxu0 %v550
      %v779 = vpop.f32.mrb[0].mxu0
      %v780 = vadd.f32 %v709, %v779
      %v781 = vpop.f32.mrb[0].mxu0
      %v782 = vadd.f32 %v711, %v781
      %783 = vdwg.mxu0
      %784 = vmatprep.subr.mxu0 %v467
      %785 = vmatpush1.msra.mxu0 %v466
      %786 = vmatprep.subr.mxu0 %v469
      %787 = vmatpush1.msra.mxu0 %v468
      %788 = vmatprep.subr.mxu0 %v471
      %789 = vmatpush1.msra.mxu0 %v470
      %790 = vmatprep.subr.mxu0 %v473
      %791 = vmatpush1.msra.mxu0 %v472
      %792 = vmatprep.subr.mxu0 %v475
      %793 = vmatpush1.msra.mxu0 %v474
      %794 = vmatprep.subr.mxu0 %v477
      %795 = vmatpush1.msra.mxu0 %v476
      %796 = vmatprep.subr.mxu0 %v479
      %797 = vmatpush1.msra.mxu0 %v478
      %798 = vmatprep.subr.mxu0 %v481
      %799 = vmatpush1.msra.mxu0 %v480
      %800 = vmatprep.subr.mxu0 %v483
      %801 = vmatpush1.msra.mxu0 %v482
      %802 = vmatprep.subr.mxu0 %v485
      %803 = vmatpush1.msra.mxu0 %v484
      %804 = vmatprep.subr.mxu0 %v487
      %805 = vmatpush1.msra.mxu0 %v486
      %806 = vmatprep.subr.mxu0 %v489
      %807 = vmatpush1.msra.mxu0 %v488
      %808 = vmatprep.subr.mxu0 %v491
      %809 = vmatpush1.msra.mxu0 %v490
      %810 = vmatprep.subr.mxu0 %v493
      %811 = vmatpush1.msra.mxu0 %v492
      %812 = vmatprep.subr.mxu0 %v495
      %813 = vmatpush1.msra.mxu0 %v494
      %814 = vmatprep.subr.mxu0 %v497
      %815 = vmatpush1.msra.mxu0 %v496
      %816 = vmatprep.subr.mxu0 %v499
      %817 = vmatpush1.msra.mxu0 %v498
      %818 = vmatprep.subr.mxu0 %v501
      %819 = vmatpush1.msra.mxu0 %v500
      %820 = vmatprep.subr.mxu0 %v503
      %821 = vmatpush1.msra.mxu0 %v502
      %822 = vmatprep.subr.mxu0 %v505
      %823 = vmatpush1.msra.mxu0 %v504
      %824 = vmatprep.subr.mxu0 %v507
      %825 = vmatpush1.msra.mxu0 %v506
      %826 = vmatprep.subr.mxu0 %v509
      %827 = vmatpush1.msra.mxu0 %v508
      %828 = vmatprep.subr.mxu0 %v511
      %829 = vmatpush1.msra.mxu0 %v510
      %830 = vmatprep.subr.mxu0 %v513
      %831 = vmatpush1.msra.mxu0 %v512
      %832 = vmatprep.subr.mxu0 %v515
      %833 = vmatpush1.msra.mxu0 %v514
      %834 = vmatprep.subr.mxu0 %v517
      %835 = vmatpush1.msra.mxu0 %v516
      %836 = vmatprep.subr.mxu0 %v519
      %837 = vmatpush1.msra.mxu0 %v518
      %838 = vmatprep.subr.mxu0 %v521
      %839 = vmatpush1.msra.mxu0 %v520
      %840 = vmatprep.subr.mxu0 %v523
      %841 = vmatpush1.msra.mxu0 %v522
      %842 = vmatprep.subr.mxu0 %v525
      %843 = vmatpush1.msra.mxu0 %v524
      %844 = vmatprep.subr.mxu0 %v527
      %845 = vmatpush1.msra.mxu0 %v526
      %846 = vmatprep.subr.mxu0 %v529
      %847 = vmatpush1.msra.mxu0 %v528
      %848 = vmatprep.mubr.f32.mxu0 %v562
      %849 = vmatmul.mubr.f32.gmra.mrb[0].mxu0 %v558
      %v850 = vpop.f32.mrb[0].mxu0
      %v851 = vadd.f32 %v780, %v850
      %v852 = vpop.f32.mrb[0].mxu0
      %v853 = vadd.f32 %v782, %v852
      %854 = vdwg.mxu0
      %v857 = vcombine.low %v851, %v853
      %v859 = vunpack.c.l.s4 1966171168
      %v860 = vunpack.c.0.s8 %v859
      %v861 = vlaneseq
      %v862 = vshrl.u32 %v861, 7
      %v863 = vsub.s32 %v860, %v862
      %v864 = vrot.slane %v857, %v863
      %v866 = vunpack.c.l.s4 1966171168
      %v867 = vunpack.c.0.s8 %v866
      %v868 = vlaneseq
      %v869 = vshrl.u32 %v868, 7
      %v870 = vsub.s32 %v867, %v869
      %v871 = vrot.slane %v864, %v870
      %vm873 = vcmp.lt.s32.totalorder %v139, 256
      %vm874 = vmand %vm140, %vm873
      %875 = vst.msk [vmem:[%s138 + $0x1] sm:$0x3] %vm874, %v871
      %p876 = scmp.lt.s32.totalorder %s13, 1
      %s877 = scalar_select %p876, %s13, 1
      %s878 = smul.addr %s877, 4
      %s879 = scalar_lea.vmem %s2, %s878
      // Predicated region
      $region29: #{lambda_layer.1} parent=27 // pred_check
        %p880 = pneg %p78
      $region30: #{lambda_layer.1} parent=27 // pred_check_branch
        %882 = sbr.rel (%p880) target = $region32
      $region31: #{lambda_layer.1} parent=27 // pred_region
        _
      $region32: #{lambda_layer.1} parent=27 // pred_fallthru
        _
    $region28: #{lambda_layer.1} parent=5 // pred_fallthru
      _
    %p883 = scmp.le.s32.totalorder 2, %s8
    // Predicated region
    $region33: #{lambda_layer.1} parent=5 // pred_check
      %p884 = pneg %p883
    $region34: #{lambda_layer.1} parent=5 // pred_check_branch
      %886 = sbr.rel (%p884) target = $region36
    $region35: #{lambda_layer.1} parent=5 // pred_region
      %s887 = ssub.s32 %s8, 2
      // Predicated region
      $region37: #{lambda_layer.1} parent=35 // pred_check
        %p888 = pneg %p84
      $region38: #{lambda_layer.1} parent=35 // pred_check_branch
        %890 = sbr.rel (%p888) target = $region40
      $region39: #{lambda_layer.1} parent=35 // pred_region
        %p891 = scmp.lt.s32.totalorder %s14, 1
        %s892 = scalar_select %p891, %s14, 1
        %s893 = smul.addr %s892, 4
        %s894 = scalar_lea.vmem %s2, %s893
      $region40: #{lambda_layer.1} parent=35 // pred_fallthru
        _
    $region36: #{lambda_layer.1} parent=5 // pred_fallthru
      _
  $region6: #{lambda_layer.1} parent=0 // loop_footer
    %s12 = sadd.s32 1, %s8
  $region7: #{lambda_layer.1} parent=0 // loop_footer_branch
    %7 = sbr.rel target = $region3
  $region8: #{lambda_layer.1} parent=0 // loop_exit
    _

</llo_original>
